<compile_context>
chip_gen: v6e
topology: v6e:2x2x1
jax: 0.10.0
libtpu: 0.0.40
codegen_flags: <defaults>
</compile_context>

<pallas_src>
import math
import functools

import jax
import jax.numpy as jnp
from jax.experimental import pallas as pl
from jax.experimental.pallas import tpu as pltpu


def _round_up(x: int, m: int) -> int:
    return (x + m - 1) // m * m


def _bert_embedding_kernel(ids_ref,       # SMEM (padded_tokens,) int32  (scalar prefetch)
                           seg_ref,       # VMEM (TM, 1) int32
                           seg_tab_ref,   # VMEM (3, D) float32 (resident)
                           pe_ref,        # VMEM (TM, D) float32
                           tok_hbm_ref,   # HBM  (V, D) float32 (pl.ANY)
                           out_ref,       # VMEM (TM, D) float32
                           tok_rows,      # VMEM (TM, D) scratch (table dtype)
                           sem):          # DMA semaphore
    t = pl.program_id(0)
    tm = out_ref.shape[0]
    row0 = t * tm

    # 1) Launch one row-gather DMA per token of this tile (HBM -> VMEM).
    @pl.loop(0, tm)
    def _issue(i):
        tok_id = ids_ref[row0 + i]
        pltpu.make_async_copy(
            tok_hbm_ref.at[pl.ds(tok_id, 1), :],
            tok_rows.at[pl.ds(i, 1), :],
            sem,
        ).start()

    # 2) While the gather is in flight: positional + segment embedding on the VPU.
    segs = seg_ref[...]                       # (TM, 1) int32
    s_row0 = seg_tab_ref[0:1, :]              # (1, D)
    s_row1 = seg_tab_ref[1:2, :]
    s_row2 = seg_tab_ref[2:3, :]
    seg_emb = jnp.where(segs == 1, s_row1, jnp.where(segs == 2, s_row2, s_row0))
    base_emb = pe_ref[...] + seg_emb          # (TM, D) float32

    # 3) Drain the gather (each wait accounts for one same-sized row copy).
    @pl.loop(0, tm)
    def _drain(i):
        pltpu.make_async_copy(
            tok_hbm_ref.at[pl.ds(0, 1), :],
            tok_rows.at[pl.ds(i, 1), :],
            sem,
        ).wait()

    out_ref[...] = base_emb + tok_rows[...].astype(jnp.float32)


def make_positional_embedding(d_model: int, max_len: int = 512) -> jnp.ndarray:
    """Replicates PositionalEmbedding buffer: pe[max_len, d_model] (handles odd D)."""
    position = jnp.arange(0, max_len, dtype=jnp.float32)[:, None]            # (L, 1)
    div_term = jnp.exp(jnp.arange(0, d_model, 2, dtype=jnp.float32)
                       * (-(math.log(10000.0) / d_model)))                   # (ceil(D/2),)
    ang = position * div_term                                                # (L, ceil(D/2))
    pe = jnp.zeros((max_len, d_model), dtype=jnp.float32)
    pe = pe.at[:, 0::2].set(jnp.sin(ang))
    pe = pe.at[:, 1::2].set(jnp.cos(ang)[:, : d_model // 2])
    return pe


@functools.partial(jax.jit, static_argnames=("tile_rows",))
def bert_embedding(sequence, segment_label, tok_table, seg_table, pe_table,
                   *, tile_rows: int = 512):
    """sequence/segment_label: [B, S] int32.  Returns [B, S, D] float32."""
    B, S = sequence.shape
    V, D = tok_table.shape
    num_tokens = B * S

    # Flat [B*S, D] token tiling; TM rows per grid step (multiple of 8 sublanes).
    tm = min(tile_rows, _round_up(num_tokens, 8))
    padded = _round_up(num_tokens, tm)
    pad = padded - num_tokens
    num_tiles = padded // tm

    ids_flat = jnp.pad(sequence.reshape(-1).astype(jnp.int32), (0, pad))
    segs_flat = jnp.pad(segment_label.reshape(-1).astype(jnp.int32),
                        (0, pad)).reshape(padded, 1)

    # PositionalEmbedding.forward: pe[:, :S] broadcast over batch, flattened to rows.
    pe_rows = jnp.broadcast_to(pe_table[:S][None], (B, S, D)).reshape(num_tokens, D)
    pe_rows = jnp.pad(pe_rows, ((0, pad), (0, 0))).astype(jnp.float32)

    # True traffic: ids+segs + (token read, pe read, out write) per row; ~0 FLOPs.
    cost = pl.CostEstimate(
        flops=2 * padded * D,
        transcendentals=0,
        bytes_accessed=int(padded * (4 + 4 + 3 * D * 4) + 3 * D * 4),
    )

    out_flat = pl.pallas_call(
        _bert_embedding_kernel,
        out_shape=jax.ShapeDtypeStruct((padded, D), jnp.float32),
        grid_spec=pltpu.PrefetchScalarGridSpec(
            num_scalar_prefetch=1,                      # token ids -> SMEM
            grid=(num_tiles,),
            in_specs=[
                pl.BlockSpec((tm, 1), lambda t, ids: (t, 0)),   # segment ids (vector)
                pl.BlockSpec((3, D), lambda t, ids: (0, 0)),    # segment table (resident)
                pl.BlockSpec((tm, D), lambda t, ids: (t, 0)),   # positional rows
                pl.BlockSpec(memory_space=pl.ANY),              # token table stays in HBM
            ],
            out_specs=pl.BlockSpec((tm, D), lambda t, ids: (t, 0)),
            scratch_shapes=[
                pltpu.VMEM((tm, D), tok_table.dtype),           # gathered token rows
                pltpu.SemaphoreType.DMA,                        # gather completion sem
            ],
        ),
        compiler_params=pltpu.CompilerParams(
            dimension_semantics=("parallel",),
        ),
        cost_estimate=cost,
    )(ids_flat, segs_flat, seg_table, pe_rows, tok_table)

    # Dropout (p=0.1) in eval mode == identity.
    return out_flat[:num_tokens].reshape(B, S, D)


if __name__ == "__main__":
    # Small shapes consistent with the module (embed_size chosen lane-dense).
    B, S = 2, 8
    VOCAB = 64
    D = 128          # embed_size
    MAX_LEN = 512

    key = jax.random.PRNGKey(0)
    k_tok, k_seg, k_ids, k_segids = jax.random.split(key, 4)

    # nn.Embedding default init ~ N(0, 1); padding_idx=0 row is zeroed.
    tok_table = jax.random.normal(k_tok, (VOCAB, D), dtype=jnp.float32).at[0, :].set(0.0)
    seg_table = jax.random.normal(k_seg, (3, D), dtype=jnp.float32).at[0, :].set(0.0)

    pe_table = make_positional_embedding(D, MAX_LEN)

    sequence = jax.random.randint(k_ids, (B, S), 0, VOCAB, dtype=jnp.int32)
    segment_label = jax.random.randint(k_segids, (B, S), 0, 3, dtype=jnp.int32)

    out = bert_embedding(sequence, segment_label, tok_table, seg_table, pe_table)
    out = jax.block_until_ready(out)

    # Reference check in plain JAX.
    ref = tok_table[sequence] + seg_table[segment_label] + pe_table[None, :S, :]
    assert out.shape == (B, S, D)
    assert jnp.allclose(out, ref, atol=1e-5), "mismatch vs reference"

    print("KERNEL_OK")
</pallas_src>

<mosaic_0001>
module attributes {stable_mosaic.version = 11 : i64} {
  func.func @_bert_embedding_kernel(%arg0: i32, %arg1: memref<16xi32, #tpu.memory_space<smem>>, %arg2: memref<16x1xi32, #tpu.memory_space<vmem>>, %arg3: memref<3x128xf32, #tpu.memory_space<vmem>>, %arg4: memref<16x128xf32, #tpu.memory_space<vmem>>, %arg5: memref<64x128xf32, #tpu.memory_space<any>>, %arg6: memref<16x128xf32, #tpu.memory_space<vmem>>, %arg7: memref<16x128xf32, #tpu.memory_space<vmem>>, %arg8: memref<!tpu.dma_semaphore, #tpu.memory_space<semaphore_mem>>) attributes {dimension_semantics = [#tpu.dimension_semantics<parallel>], iteration_bounds = array<i64: 1>, scalar_prefetch = 1 : i64, scratch_operands = 2 : i64, tpu.core_type = #tpu.core_type<tc>, window_params = [{transform_indices = @transform_0, window_bounds = array<i64: 16, 1>}, {pipeline_mode = #tpu.pipeline_mode<synchronous>, transform_indices = @transform_1, window_bounds = array<i64: 3, 128>}, {transform_indices = @transform_2, window_bounds = array<i64: 16, 128>}, {}, {transform_indices = @transform_4, window_bounds = array<i64: 16, 128>}]} {
    %c16_i32 = arith.constant 16 : i32
    %0 = arith.muli %arg0, %c16_i32 : i32
    %c0_i32 = arith.constant 0 : i32
    %c16_i32_0 = arith.constant 16 : i32
    %1 = arith.addi %c0_i32, %c16_i32_0 : i32
    %c1_i32 = arith.constant 1 : i32
    scf.for %arg9 = %c0_i32 to %1 step %c1_i32  : i32 {
      %c1_i32_18 = arith.constant 1 : i32
      %28 = arith.muli %arg9, %c1_i32_18 : i32
      %c0_i32_19 = arith.constant 0 : i32
      %29 = arith.addi %c0_i32_19, %28 : i32
      %30 = arith.addi %0, %29 : i32
      %31 = arith.index_cast %30 : i32 to index
      %32 = memref.load %arg1[%31] : memref<16xi32, #tpu.memory_space<smem>>
      %c0_i32_20 = arith.constant 0 : i32
      %33 = tpu.memref_slice %arg5[%32, %c0_i32_20] : memref<64x128xf32, #tpu.memory_space<any>> -> memref<1x128xf32, #tpu.memory_space<any>>
      %c0_i32_21 = arith.constant 0 : i32
      %34 = tpu.memref_slice %arg7[%29, %c0_i32_21] : memref<16x128xf32, #tpu.memory_space<vmem>> -> memref<1x128xf32, #tpu.memory_space<vmem>>
      tpu.enqueue_dma source(%33 : memref<1x128xf32, #tpu.memory_space<any>>) target(%34 : memref<1x128xf32, #tpu.memory_space<vmem>>) target_semaphore(%arg8 : memref<!tpu.dma_semaphore, #tpu.memory_space<semaphore_mem>>)
    }
    %c16_i32_1 = arith.constant 16 : i32
    %c0 = arith.constant 0 : index
    %c0_2 = arith.constant 0 : index
    %2 = vector.load %arg2[%c0, %c0_2] : memref<16x1xi32, #tpu.memory_space<vmem>>, vector<16x1xi32>
    %c0_3 = arith.constant 0 : index
    %c0_4 = arith.constant 0 : index
    %3 = vector.load %arg3[%c0_3, %c0_4] : memref<3x128xf32, #tpu.memory_space<vmem>>, vector<1x128xf32>
    %c1 = arith.constant 1 : index
    %c0_5 = arith.constant 0 : index
    %4 = vector.load %arg3[%c1, %c0_5] : memref<3x128xf32, #tpu.memory_space<vmem>>, vector<1x128xf32>
    %c2 = arith.constant 2 : index
    %c0_6 = arith.constant 0 : index
    %5 = vector.load %arg3[%c2, %c0_6] : memref<3x128xf32, #tpu.memory_space<vmem>>, vector<1x128xf32>
    %c1_i32_7 = arith.constant 1 : i32
    %6 = vector.broadcast %c1_i32_7 : i32 to vector<16x1xi32>
    %7 = arith.cmpi eq, %2, %6 : vector<16x1xi32>
    %c2_i32 = arith.constant 2 : i32
    %8 = vector.broadcast %c2_i32 : i32 to vector<16x1xi32>
    %9 = arith.cmpi eq, %2, %8 : vector<16x1xi32>
    %10 = vector.shape_cast %9 : vector<16x1xi1> to vector<16x1xi1>
    %11 = vector.broadcast %10 : vector<16x1xi1> to vector<16x128xi1>
    %12 = vector.shape_cast %5 : vector<1x128xf32> to vector<1x128xf32>
    %13 = vector.broadcast %12 : vector<1x128xf32> to vector<16x128xf32>
    %14 = vector.shape_cast %3 : vector<1x128xf32> to vector<1x128xf32>
    %15 = vector.broadcast %14 : vector<1x128xf32> to vector<16x128xf32>
    %16 = arith.select %11, %13, %15 : vector<16x128xi1>, vector<16x128xf32>
    %17 = vector.shape_cast %7 : vector<16x1xi1> to vector<16x1xi1>
    %18 = vector.broadcast %17 : vector<16x1xi1> to vector<16x128xi1>
    %19 = vector.shape_cast %4 : vector<1x128xf32> to vector<1x128xf32>
    %20 = vector.broadcast %19 : vector<1x128xf32> to vector<16x128xf32>
    %21 = arith.select %18, %20, %16 : vector<16x128xi1>, vector<16x128xf32>
    %c0_8 = arith.constant 0 : index
    %c0_9 = arith.constant 0 : index
    %22 = vector.load %arg4[%c0_8, %c0_9] : memref<16x128xf32, #tpu.memory_space<vmem>>, vector<16x128xf32>
    %23 = arith.addf %22, %21 : vector<16x128xf32>
    %c0_i32_10 = arith.constant 0 : i32
    %c16_i32_11 = arith.constant 16 : i32
    %24 = arith.addi %c0_i32_10, %c16_i32_11 : i32
    %c1_i32_12 = arith.constant 1 : i32
    scf.for %arg9 = %c0_i32_10 to %24 step %c1_i32_12  : i32 {
      %c1_i32_18 = arith.constant 1 : i32
      %28 = arith.muli %arg9, %c1_i32_18 : i32
      %c0_i32_19 = arith.constant 0 : i32
      %29 = arith.addi %c0_i32_19, %28 : i32
      %c0_i32_20 = arith.constant 0 : i32
      %c0_i32_21 = arith.constant 0 : i32
      %30 = tpu.memref_slice %arg5[%c0_i32_20, %c0_i32_21] : memref<64x128xf32, #tpu.memory_space<any>> -> memref<1x128xf32, #tpu.memory_space<any>>
      %c0_i32_22 = arith.constant 0 : i32
      %31 = tpu.memref_slice %arg7[%29, %c0_i32_22] : memref<16x128xf32, #tpu.memory_space<vmem>> -> memref<1x128xf32, #tpu.memory_space<vmem>>
      tpu.wait_dma2 semaphore(%arg8 : memref<!tpu.dma_semaphore, #tpu.memory_space<semaphore_mem>>) src(%30 : memref<1x128xf32, #tpu.memory_space<any>>) dst(%31 : memref<1x128xf32, #tpu.memory_space<vmem>>)
    }
    %c16_i32_13 = arith.constant 16 : i32
    %c0_14 = arith.constant 0 : index
    %c0_15 = arith.constant 0 : index
    %25 = vector.load %arg7[%c0_14, %c0_15] : memref<16x128xf32, #tpu.memory_space<vmem>>, vector<16x128xf32>
    %26 = arith.addf %23, %25 : vector<16x128xf32>
    %c0_16 = arith.constant 0 : index
    %c0_17 = arith.constant 0 : index
    %27 = vector.load %arg6[%c0_16, %c0_17] : memref<16x128xf32, #tpu.memory_space<vmem>>, vector<16x128xf32>
    tpu.vector_store %arg6[%c0_16, %c0_17], %26 {strides = array<i32>} : memref<16x128xf32, #tpu.memory_space<vmem>>, vector<16x128xf32>,
    return
  }
  func.func @transform_0(%arg0: i32, %arg1: memref<16xi32, #tpu.memory_space<smem>>) -> (i32, i32) {
    %c0_i32 = arith.constant 0 : i32
    %c0_i32_0 = arith.constant 0 : i32
    return %arg0, %c0_i32 : i32, i32
  }
  func.func @transform_1(%arg0: i32, %arg1: memref<16xi32, #tpu.memory_space<smem>>) -> (i32, i32) {
    %c0_i32 = arith.constant 0 : i32
    %c0_i32_0 = arith.constant 0 : i32
    %c0_i32_1 = arith.constant 0 : i32
    return %c0_i32, %c0_i32_0 : i32, i32
  }
  func.func @transform_2(%arg0: i32, %arg1: memref<16xi32, #tpu.memory_space<smem>>) -> (i32, i32) {
    %c0_i32 = arith.constant 0 : i32
    %c0_i32_0 = arith.constant 0 : i32
    return %arg0, %c0_i32 : i32, i32
  }
  func.func @transform_4(%arg0: i32, %arg1: memref<16xi32, #tpu.memory_space<smem>>) -> (i32, i32) {
    %c0_i32 = arith.constant 0 : i32
    %c0_i32_0 = arith.constant 0 : i32
    return %arg0, %c0_i32 : i32, i32
  }
}

</mosaic_0001>

<llo_original>
// kernel: bert_embedding.1
$region0: #{bert_embedding.1}
  #allocation0 [shape = 'u32[]', space=smem, size = 0x4, offset = 0x4, fixed_abs, tag = 'smem constant byte address 0x4 - core index']
  #allocation1 [shape = 'u32[144,128]{1,0:T(1,128)}', space=vmem, size = 0x12000, scoped, tag = 'internal scratch']
  #allocation2 [shape = 'f32[16,128]{1,0:T(8,128)}', space=vmem, size = 0x2000, scoped, tag = 'scratch operand']
  #allocation3 [shape = 's32[1]{0}', space=sflag, size = 0x4, scoped, tag = 'scratch operand']
  #allocation4 [shape = 's32[1]{0}', space=sflag, size = 0x4, scoped, tag = 'scoped memory for bert_embedding.1']
  #allocation5 [shape = 'u8[512]{0}', space=smem, size = 0x200, scoped, tag = 'prefetched SMEM operand 0']
  #allocation10 [shape = 's32[]', space=sflag, size = 0x4, offset = 0, fixed_abs, tag = 'sflag constant byte address 0x0 - dummy sync flag']
  %s0 = inlined_call_operand.vmem [shape: s32[16], index: 0, kind: input, shape index: {}]
  %s1 = inlined_call_operand.vmem [shape: s32[16,1], index: 1, kind: input, shape index: {}]
  %s2 = inlined_call_operand.hbm [shape: f32[3,128], index: 2, kind: input, shape index: {}]
  %s3 = inlined_call_operand.vmem [shape: f32[16,128], index: 3, kind: input, shape index: {}]
  %s4 = inlined_call_operand.vmem [shape: f32[64,128], index: 4, kind: input, shape index: {}]
  %s5 = inlined_call_operand.hbm [shape: f32[16,128], index: 5, kind: output, shape index: {}]
  %s6 = sld [smem:[#allocation0]]
  $region70: #{bert_embedding.1} parent=0
    _
  %s8 = ssub.s32 1, %s6
  %s9 = scalar_select 0, %s8, %s6
  %s10 = sshll.u32 %s0, 4
  %s11 = int_to_ptr.vmem [resolvable:$true] %s10
  %13 = dma.vmem_to_smem %s11, 16, [#allocation5], [#allocation4]
  %14 = dma.done [#allocation4], 16
  %15 = sfence
  $region1: #{bert_embedding.1} parent=0
    #allocation6 [shape = 'u8[2048]{0}', space=vmem, size = 0x800, scoped, tag = 'input window, operand 2, single buffered']
    #allocation7 [shape = 's32[1]{0}', space=sflag, size = 0x4, scoped, tag = 'scoped memory for bert_embedding.1']
    #allocation8 [shape = 's32[1]{0}', space=sflag, size = 0x4, scoped, tag = 'scoped memory for bert_embedding.1']
    #allocation9 [shape = 'u8[8192]{0}', space=vmem, size = 0x2000, scoped, tag = 'output window, operand 0, single buffered']
    %16 = vsyncpa [#allocation7], 0
    %17 = vsyncpa [#allocation8], 0
    // Predicated region
    $region2: #{bert_embedding.1} parent=1 // pred_check
      _
    $region3: #{bert_embedding.1} parent=1 // pred_check_branch
      %19 = sbr.rel (0) target = $region5
    $region4: #{bert_embedding.1} parent=1 // pred_region
      _
    $region5: #{bert_embedding.1} parent=1 // pred_fallthru
      _
    // Predicated region
    $region6: #{bert_embedding.1} parent=1 // pred_check
      _
    $region7: #{bert_embedding.1} parent=1 // pred_check_branch
      %21 = sbr.rel (0) target = $region9
    $region8: #{bert_embedding.1} parent=1 // pred_region
      %s23 = ssub.s32 64, 64
      %24 = vsyncadd [#allocation7], %s23
      %s26 = sshll.u32 [#allocation6], 4
      %s27 = int_to_ptr.vmem [resolvable:$true] %s26
      %29 = dma.hbm_to_vmem [thread:$0]  %s2, 64, %s27, [#allocation7]
    $region9: #{bert_embedding.1} parent=1 // pred_fallthru
      _
    // Predicated region
    $region10: #{bert_embedding.1} parent=1 // pred_check
      _
    $region11: #{bert_embedding.1} parent=1 // pred_check_branch
      %31 = sbr.rel (0) target = $region13
    $region12: #{bert_embedding.1} parent=1 // pred_region
      _
    $region13: #{bert_embedding.1} parent=1 // pred_fallthru
      _
    // Predicated region
    $region14: #{bert_embedding.1} parent=1 // pred_check
      _
    $region15: #{bert_embedding.1} parent=1 // pred_check_branch
      %33 = sbr.rel (0) target = $region17
    $region16: #{bert_embedding.1} parent=1 // pred_region
      %34 = dma.done [#allocation7], 64
    $region17: #{bert_embedding.1} parent=1 // pred_fallthru
      _
    %s35 = smul.u32 0, 16
    loop: start=0, step=1, limit=16
    $region18: #{bert_embedding.1} parent=1 // loop_pre_header
      _
    $region19: #{bert_embedding.1} parent=1 // loop_header
      %s37 = sphi 0, %s41
      %p38 = scmp.ge.s32.totalorder %s37, 16
    $region20: #{bert_embedding.1} parent=1 // loop_header_branch
      %40 = sbr.rel (%p38) target = $region24
    $region21: #{bert_embedding.1} parent=1 // loop_body
      %s42 = sadd.s32 %s35, %s37
      %s43 = sld [smem:[#allocation5 + %s42]]
      %s44 = scalar_lea.vmem %s4, %s43
      %s45 = scalar_lea.vmem [#allocation2], %s37
      %p47 = scmp.lt.u32.totalorder 1, 8
      %p48 = pneg %p47
      // Predicated region
      $region25: #{bert_embedding.1} parent=21 // pred_check
        _
      $region26: #{bert_embedding.1} parent=21 // pred_check_branch
        %50 = sbr.rel (%p47) target = $region28
      $region27: #{bert_embedding.1} parent=21 // pred_region
        %s66 = sand.u32 1, 7
        %p67 = scmp.eq.s32.totalorder %s66, 0
        %p68 = pneg %p67
        // Predicated region
        $region40: #{bert_embedding.1} parent=27 // pred_check
          _
        $region41: #{bert_embedding.1} parent=27 // pred_check_branch
          %70 = sbr.rel (%p67) target = $region43
        $region42: #{bert_embedding.1} parent=27 // pred_region
          %s71 = sand.u32 1, 7
          %s72 = ssub.s32 1, %s71
          %s73 = scalar_lea.vmem %s44, %s72
          %s74 = ssub.s32 1, %s71
          %s75 = scalar_lea.vmem %s45, %s74 [#allocation2]
          %s76 = sshll.u32 1, %s71
          %s77 = ssub.s32 %s76, 1
          loop: start=0, step=1, limit=1
          $region44: #{bert_embedding.1} parent=42 // loop_pre_header
            _
          $region45: #{bert_embedding.1} parent=42 // loop_header
            %s79 = sphi 0, %s83
            %p80 = scmp.ge.s32.totalorder %s79, 1
            %s84 = sphi %s73, %s73
            %s85 = sphi %s75, %s75
          $region46: #{bert_embedding.1} parent=42 // loop_header_branch
            %82 = sbr.rel (%p80) target = $region50
          $region47: #{bert_embedding.1} parent=42 // loop_body
            %v86 = vld [vmem:[%s84] sm:%s77]
            %87 = vst [vmem:[%s85] sm:%s77] %v86
          $region48: #{bert_embedding.1} parent=42 // loop_footer
            %s83 = sadd.s32 1, %s79
          $region49: #{bert_embedding.1} parent=42 // loop_footer_branch
            %78 = sbr.rel target = $region45
          $region50: #{bert_embedding.1} parent=42 // loop_exit
            _
        $region43: #{bert_embedding.1} parent=27 // pred_fallthru
          _
      $region28: #{bert_embedding.1} parent=21 // pred_fallthru
        _
      // Predicated region
      $region29: #{bert_embedding.1} parent=21 // pred_check
        %p51 = pneg %p47
      $region30: #{bert_embedding.1} parent=21 // pred_check_branch
        %53 = sbr.rel (%p51) target = $region32
      $region31: #{bert_embedding.1} parent=21 // pred_region
        %s54 = sshll.u32 1, 1
        %s55 = ssub.s32 %s54, 1
        loop: start=0, step=1, limit=1
        $region33: #{bert_embedding.1} parent=31 // loop_pre_header
          _
        $region34: #{bert_embedding.1} parent=31 // loop_header
          %s57 = sphi 0, %s61
          %p58 = scmp.ge.s32.totalorder %s57, 1
          %s62 = sphi %s44, %s44
          %s63 = sphi %s45, %s45
        $region35: #{bert_embedding.1} parent=31 // loop_header_branch
          %60 = sbr.rel (%p58) target = $region39
        $region36: #{bert_embedding.1} parent=31 // loop_body
          %v64 = vld [vmem:[%s62] sm:%s55]
          %65 = vst [vmem:[%s63] sm:%s55] %v64
        $region37: #{bert_embedding.1} parent=31 // loop_footer
          %s61 = sadd.s32 1, %s57
        $region38: #{bert_embedding.1} parent=31 // loop_footer_branch
          %56 = sbr.rel target = $region34
        $region39: #{bert_embedding.1} parent=31 // loop_exit
          _
      $region32: #{bert_embedding.1} parent=21 // pred_fallthru
        _
      // Predicated region
      $region51: #{bert_embedding.1} parent=21 // pred_check
        _
      $region52: #{bert_embedding.1} parent=21 // pred_check_branch
        %90 = sbr.rel (0) target = $region54
      $region53: #{bert_embedding.1} parent=21 // pred_region
        %91 = vsyncadd [#allocation3], 16
      $region54: #{bert_embedding.1} parent=21 // pred_fallthru
        _
    $region22: #{bert_embedding.1} parent=1 // loop_footer
      %s41 = sadd.s32 1, %s37
    $region23: #{bert_embedding.1} parent=1 // loop_footer_branch
      %36 = sbr.rel target = $region19
    $region24: #{bert_embedding.1} parent=1 // loop_exit
      _
    %v92 = vld [vmem:[%s1] sm:$0xff]
    %v93 = vld [vmem:[%s1 + $0x8] sm:$0xff]
    %v94 = vld [vmem:[#allocation6] sm:$0x1]
    %v95 = vld [vmem:[#allocation6 + $0x1] sm:$0x1]
    %v96 = vld [vmem:[#allocation6 + $0x2] sm:$0x1]
    %vm97 = vcmp.eq.s32.totalorder %v92, 1
    %vm98 = vcmp.eq.s32.totalorder %v93, 1
    %vm99 = vcmp.eq.s32.totalorder %v92, 2
    %vm100 = vcmp.eq.s32.totalorder %v93, 2
    %v101 = vsel %vm99, 1, 0
    %v102 = vsel %vm100, 1, 0
    %103 = vset.pattern.permute.xlu0 0
    %104 = vperm.xlu0 %103, %v101
    %v105 = vpop.permute.xlu0 %104
    %106 = vset.pattern.permute.xlu0 0
    %107 = vperm.xlu0 %106, %v102
    %v108 = vpop.permute.xlu0 %107
    %vm109 = vcmp.eq.s32.totalorder %v105, 1
    %vm110 = vcmp.eq.s32.totalorder %v108, 1
    %v111 = vlaneseq
    %v112 = vshrl.u32 %v111, 7
    %v113 = vsub.s32 0, %v112
    %v114 = vrot.slane %v96, %v113
    %v115 = vlaneseq
    %v116 = vshrl.u32 %v115, 7
    %v117 = vsub.s32 0, %v116
    %v118 = vrot.slane %v94, %v117
    %v119 = vsel %vm109, %v114, %v118
    %v120 = vsel %vm110, %v114, %v118
    %v121 = vsel %vm97, 1, 0
    %v122 = vsel %vm98, 1, 0
    %123 = vset.pattern.permute.xlu0 0
    %124 = vperm.xlu0 %123, %v121
    %v125 = vpop.permute.xlu0 %124
    %126 = vset.pattern.permute.xlu0 0
    %127 = vperm.xlu0 %126, %v122
    %v128 = vpop.permute.xlu0 %127
    %vm129 = vcmp.eq.s32.totalorder %v125, 1
    %vm130 = vcmp.eq.s32.totalorder %v128, 1
    %v131 = vlaneseq
    %v132 = vshrl.u32 %v131, 7
    %v133 = vsub.s32 0, %v132
    %v134 = vrot.slane %v95, %v133
    %v135 = vsel %vm129, %v134, %v119
    %v136 = vsel %vm130, %v134, %v120
    %v137 = vld [vmem:[%s3] sm:$0xff]
    %v138 = vld [vmem:[%s3 + $0x8] sm:$0xff]
    %v139 = vadd.f32 %v137, %v135
    %v140 = vadd.f32 %v138, %v136
    loop: start=0, step=1, limit=16
    $region55: #{bert_embedding.1} parent=1 // loop_pre_header
      _
    $region56: #{bert_embedding.1} parent=1 // loop_header
      %s142 = sphi 0, %s146
      %p143 = scmp.ge.s32.totalorder %s142, 16
    $region57: #{bert_embedding.1} parent=1 // loop_header_branch
      %145 = sbr.rel (%p143) target = $region61
    $region58: #{bert_embedding.1} parent=1 // loop_body
      %s147 = smul.u32 1, 1
      %s148 = sshll.u32 %s147, 4
      %149 = dma.done [#allocation3], %s148
    $region59: #{bert_embedding.1} parent=1 // loop_footer
      %s146 = sadd.s32 1, %s142
    $region60: #{bert_embedding.1} parent=1 // loop_footer_branch
      %141 = sbr.rel target = $region56
    $region61: #{bert_embedding.1} parent=1 // loop_exit
      _
    %v150 = vld [vmem:[#allocation2] sm:$0xff]
    %v151 = vld [vmem:[#allocation2 + $0x8] sm:$0xff]
    %v152 = vadd.f32 %v139, %v150
    %v153 = vadd.f32 %v140, %v151
    %154 = vst [vmem:[#allocation9] sm:$0xff] %v152
    %155 = vst [vmem:[#allocation9 + $0x8] sm:$0xff] %v153
    // Predicated region
    $region62: #{bert_embedding.1} parent=1 // pred_check
      _
    $region63: #{bert_embedding.1} parent=1 // pred_check_branch
      %157 = sbr.rel (0) target = $region65
    $region64: #{bert_embedding.1} parent=1 // pred_region
      %s159 = ssub.s32 256, 256
      %160 = vsyncadd [#allocation8], %s159
      %s161 = sshll.u32 [#allocation9], 4
      %s162 = int_to_ptr.vmem [resolvable:$true] %s161
      %167 = dma.vmem_to_hbm [thread:$0]  %s162, 256, %s5, [#allocation8], 128, 128, 8
    $region65: #{bert_embedding.1} parent=1 // pred_fallthru
      _
    // Predicated region
    $region66: #{bert_embedding.1} parent=1 // pred_check
      _
    $region67: #{bert_embedding.1} parent=1 // pred_check_branch
      %169 = sbr.rel (0) target = $region69
    $region68: #{bert_embedding.1} parent=1 // pred_region
      %170 = dma.done [#allocation8], 256
    $region69: #{bert_embedding.1} parent=1 // pred_fallthru
      _
    %171 = vsyncpa [#allocation7], 1
    %172 = vsyncpa [#allocation8], 1
  %173 = vsyncmov [#allocation3]
  %s174 = vpop.sfrf %173
  %p175 = scmp.eq.s32.totalorder %s174, 0
  %p176 = pneg %p175
  %178 = shalt.err (%p176)

</llo_original>
